<compile_context>
chip_gen: v6e
topology: v6e:2x2x1
jax: 0.10.0
libtpu: 0.0.40
codegen_flags: <defaults>
</compile_context>

<pallas_src>
import jax
import jax.numpy as jnp
from jax import lax
from jax.experimental import pallas as pl
from jax.experimental.pallas import tpu as pltpu


def _round_up(x: int, m: int) -> int:
    return ((x + m - 1) // m) * m


def _make_seq_kernel(tb: int):
    """Recurrent kernel: tb timesteps of h = tanh(x_proj[t] + h @ W_hh^T)."""

    def kernel(xproj_ref, whh_ref, h0_ref, out_ref, h_carry_ref):
        # Seed the persistent hidden-state scratch on the very first grid step.
        @pl.when(pl.program_id(0) == 0)
        def _():
            h_carry_ref[...] = h0_ref[...]

        # Load VMEM-resident operands ONCE per grid block.
        w_hh = whh_ref[...]          # (hp, hp), compute dtype (bf16 on perf path)
        h = h_carry_ref[...]         # (bp, hp), carried in vregs below

        def step(s, h):
            # Single MXU push per step: (bp, hp) @ (hp, hp), f32 accumulation.
            acc = jnp.dot(h, w_hh, preferred_element_type=jnp.float32)
            # Bias is pre-folded into x_proj; add + tanh stay in f32 (VPU/EUP).
            h_new_f32 = jnp.tanh(acc + xproj_ref[s].astype(jnp.float32))
            h_new = h_new_f32.astype(out_ref.dtype)
            out_ref[s] = h_new       # lane-dense full-tile store
            return h_new             # hidden carried in vregs, not VMEM

        h = lax.fori_loop(0, tb, step, h, unroll=True)
        # Hand the hidden state to the next grid block (one scratch write/block).
        h_carry_ref[...] = h

    return kernel


def constrained_rnn_cell_sequence(x_seq, h0, w_ih, w_hh, b_ih, b_hh, *,
                                  steps_per_block: int = 8,
                                  compute_dtype=jnp.bfloat16):
    """Run the ConstrainedRNNCell recurrence over a whole sequence.

    x_seq: (T, B, I), h0: (B, H), w_ih: (H, I), w_hh: (H, H), b_*: (H,).
    The cell output tanh(...) is fed back as the next hidden state, exactly as
    the surrounding model drives the layer step by step.
    Returns the per-step outputs, shape (T, B, H), in x_seq.dtype.
    """
    T, B, I = x_seq.shape
    H = h0.shape[1]

    bp = _round_up(B, 8)                 # sublane-aligned batch
    hp = _round_up(max(H, 128), 128)     # lane-dense hidden / output

    tb = max(1, min(int(steps_per_block), T))
    Tp = _round_up(T, tb)                # pad T, never fall back to tb=1

    f32 = jnp.float32
    cdt = compute_dtype

    w_ih_f = jnp.asarray(w_ih, f32)
    w_hh_f = jnp.asarray(w_hh, f32)
    bias = jnp.asarray(b_ih, f32) + jnp.asarray(b_hh, f32)

    # ---- Hoisted input projection (one parallel matmul, M = T*B) -----------
    prec = lax.Precision.HIGHEST if cdt == jnp.float32 else lax.Precision.DEFAULT
    proj = jnp.einsum("tbi,hi->tbh", x_seq.astype(f32), w_ih_f,
                      precision=prec) + bias                     # (T, B, H)

    # Only the (Tp, bp, hp) activation is padded / materialized; padded
    # rows / columns / tail timesteps are exact zeros.
    x_proj = jnp.zeros((Tp, bp, hp), cdt).at[:T, :B, :H].set(proj.astype(cdt))

    # VMEM-resident recurrent weight (transposed, zero-padded) and initial h.
    w_hh_t = jnp.zeros((hp, hp), f32).at[:H, :H].set(w_hh_f.T).astype(cdt)
    h0_p = jnp.zeros((bp, hp), f32).at[:B, :H].set(h0.astype(f32)).astype(cdt)

    kernel = _make_seq_kernel(tb)

    out_p = pl.pallas_call(
        kernel,
        out_shape=jax.ShapeDtypeStruct((Tp, bp, hp), cdt),
        grid=(Tp // tb,),
        in_specs=[
            pl.BlockSpec((tb, bp, hp), lambda g: (g, 0, 0)),  # x_proj block
            pl.BlockSpec((hp, hp), lambda g: (0, 0)),         # W_hh^T resident
            pl.BlockSpec((bp, hp), lambda g: (0, 0)),         # h0 resident
        ],
        out_specs=pl.BlockSpec((tb, bp, hp), lambda g: (g, 0, 0)),
        scratch_shapes=[pltpu.VMEM((bp, hp), cdt)],           # hidden carry
        compiler_params=pltpu.CompilerParams(
            dimension_semantics=("arbitrary",)),              # true recurrence
    )(x_proj, w_hh_t, h0_p)

    return out_p[:T, :B, :H].astype(x_seq.dtype)


def constrained_rnn_cell_forward(x, h, w_ih, w_hh, b_ih, b_hh):
    """One time step: matches ConstrainedRNNCell.forward(x, h) -> (output, None)
    with return_recurrent_state == False and shared_complexity == None.

    A single tiny step is dispatch-overhead dominated; the fused-sequence entry
    point above is the performance path.  f32 here to match the module exactly."""
    out_seq = constrained_rnn_cell_sequence(
        x[None], h, w_ih, w_hh, b_ih, b_hh,
        steps_per_block=1, compute_dtype=jnp.float32)
    return out_seq[0], None


if __name__ == "__main__":
    batch, input_size, hidden_size, seq_len = 2, 16, 32, 10

    key = jax.random.PRNGKey(0)
    k_x, k_h, k_wi, k_wh, k_bi, k_bh = jax.random.split(key, 6)

    x_seq = jax.random.normal(k_x, (seq_len, batch, input_size), dtype=jnp.float32)
    h0 = jax.random.normal(k_h, (batch, hidden_size), dtype=jnp.float32)

    # PyTorch RNNCell parameter shapes / init bound.
    bound = 1.0 / jnp.sqrt(hidden_size)
    w_ih = jax.random.uniform(k_wi, (hidden_size, input_size),
                              minval=-bound, maxval=bound, dtype=jnp.float32)
    w_hh = jax.random.uniform(k_wh, (hidden_size, hidden_size),
                              minval=-bound, maxval=bound, dtype=jnp.float32)
    b_ih = jax.random.uniform(k_bi, (hidden_size,),
                              minval=-bound, maxval=bound, dtype=jnp.float32)
    b_hh = jax.random.uniform(k_bh, (hidden_size,),
                              minval=-bound, maxval=bound, dtype=jnp.float32)

    # Reference: apply the module forward step-by-step in plain JAX (f32 exact).
    hi = lax.Precision.HIGHEST
    h = h0
    refs = []
    for t in range(seq_len):
        h = jnp.tanh(jnp.dot(x_seq[t], w_ih.T, precision=hi) + b_ih
                     + jnp.dot(h, w_hh.T, precision=hi) + b_hh)
        refs.append(h)
    ref_seq = jnp.stack(refs)

    # --- Fused-sequence kernel, bf16 MXU operands (main performance path) ---
    out_seq = jax.block_until_ready(
        constrained_rnn_cell_sequence(x_seq, h0, w_ih, w_hh, b_ih, b_hh,
                                      steps_per_block=8))
    assert out_seq.shape == (seq_len, batch, hidden_size)
    err_bf16 = float(jnp.max(jnp.abs(out_seq - ref_seq)))
    assert err_bf16 < 5e-2, err_bf16   # bf16 recurrence vs f32 reference

    # --- Same kernel, f32 compute (tight numerical check) -------------------
    out_seq_f32 = jax.block_until_ready(
        constrained_rnn_cell_sequence(x_seq, h0, w_ih, w_hh, b_ih, b_hh,
                                      steps_per_block=4,
                                      compute_dtype=jnp.float32))
    assert out_seq_f32.shape == (seq_len, batch, hidden_size)
    assert jnp.allclose(out_seq_f32, ref_seq, atol=1e-4, rtol=1e-4), \
        float(jnp.max(jnp.abs(out_seq_f32 - ref_seq)))

    # --- Single-step path (exact module forward signature) ------------------
    out_1, rec_state = constrained_rnn_cell_forward(
        x_seq[0], h0, w_ih, w_hh, b_ih, b_hh)
    out_1 = jax.block_until_ready(out_1)
    ref_1 = jnp.tanh(jnp.dot(x_seq[0], w_ih.T, precision=hi) + b_ih
                     + jnp.dot(h0, w_hh.T, precision=hi) + b_hh)
    assert out_1.shape == (batch, hidden_size)
    assert rec_state is None
    assert jnp.allclose(out_1, ref_1, atol=1e-4, rtol=1e-4), \
        float(jnp.max(jnp.abs(out_1 - ref_1)))

    print("KERNEL_OK")
</pallas_src>

<mosaic_0001>
module attributes {stable_mosaic.version = 11 : i64} {
  func.func @kernel(%arg0: i32, %arg1: memref<8x8x128xbf16, #tpu.memory_space<vmem>>, %arg2: memref<128x128xbf16, #tpu.memory_space<vmem>>, %arg3: memref<8x128xbf16, #tpu.memory_space<vmem>>, %arg4: memref<8x8x128xbf16, #tpu.memory_space<vmem>>, %arg5: memref<8x128xbf16, #tpu.memory_space<vmem>>) attributes {dimension_semantics = [#tpu.dimension_semantics<arbitrary>], iteration_bounds = array<i64: 2>, scalar_prefetch = 0 : i64, scratch_operands = 1 : i64, tpu.core_type = #tpu.core_type<tc>, window_params = [{transform_indices = @transform_0, window_bounds = array<i64: 8, 8, 128>}, {pipeline_mode = #tpu.pipeline_mode<synchronous>, transform_indices = @transform_1, window_bounds = array<i64: 128, 128>}, {pipeline_mode = #tpu.pipeline_mode<synchronous>, transform_indices = @transform_2, window_bounds = array<i64: 8, 128>}, {transform_indices = @transform_3, window_bounds = array<i64: 8, 8, 128>}]} {
    %c0_i32 = arith.constant 0 : i32
    %0 = arith.cmpi eq, %arg0, %c0_i32 : i32
    %1 = arith.extui %0 : i1 to i32
    %c0_i32_0 = arith.constant 0 : i32
    %2 = arith.cmpi ne, %1, %c0_i32_0 : i32
    scf.if %2 {
      %c0_46 = arith.constant 0 : index
      %c0_47 = arith.constant 0 : index
      %102 = vector.load %arg3[%c0_46, %c0_47] : memref<8x128xbf16, #tpu.memory_space<vmem>>, vector<8x128xbf16>
      %c0_48 = arith.constant 0 : index
      %c0_49 = arith.constant 0 : index
      %103 = vector.load %arg5[%c0_48, %c0_49] : memref<8x128xbf16, #tpu.memory_space<vmem>>, vector<8x128xbf16>
      tpu.vector_store %arg5[%c0_48, %c0_49], %102 {strides = array<i32>} : memref<8x128xbf16, #tpu.memory_space<vmem>>, vector<8x128xbf16>,
    } else {
    }
    %c0 = arith.constant 0 : index
    %c0_1 = arith.constant 0 : index
    %3 = vector.load %arg2[%c0, %c0_1] : memref<128x128xbf16, #tpu.memory_space<vmem>>, vector<128x128xbf16>
    %c0_2 = arith.constant 0 : index
    %c0_3 = arith.constant 0 : index
    %4 = vector.load %arg5[%c0_2, %c0_3] : memref<8x128xbf16, #tpu.memory_space<vmem>>, vector<8x128xbf16>
    %c0_i32_4 = arith.constant 0 : i32
    %cst = arith.constant dense<0.000000e+00> : vector<8x128xf32>
    %5 = tpu.matmul %4, %3, %cst {dimension_numbers = #tpu.dot_dimension_numbers<[1], [0], [0], [1], [0, 0, 1, 1], [], []>} : vector<8x128xbf16>, vector<128x128xbf16>, vector<8x128xf32> -> vector<8x128xf32>
    %6 = arith.index_cast %c0_i32_4 : i32 to index
    %c0_5 = arith.constant 0 : index
    %c0_6 = arith.constant 0 : index
    %7 = vector.load %arg1[%6, %c0_5, %c0_6] : memref<8x8x128xbf16, #tpu.memory_space<vmem>>, vector<1x8x128xbf16>
    %8 = vector.shape_cast %7 : vector<1x8x128xbf16> to vector<8x128xbf16>
    %9 = arith.extf %8 : vector<8x128xbf16> to vector<8x128xf32>
    %10 = arith.addf %5, %9 : vector<8x128xf32>
    %11 = math.tanh %10 : vector<8x128xf32>
    %12 = arith.truncf %11 : vector<8x128xf32> to vector<8x128xbf16>
    %13 = arith.index_cast %c0_i32_4 : i32 to index
    %c0_7 = arith.constant 0 : index
    %c0_8 = arith.constant 0 : index
    %14 = vector.load %arg4[%13, %c0_7, %c0_8] : memref<8x8x128xbf16, #tpu.memory_space<vmem>>, vector<1x8x128xbf16>
    %15 = vector.shape_cast %14 : vector<1x8x128xbf16> to vector<8x128xbf16>
    %16 = vector.shape_cast %12 : vector<8x128xbf16> to vector<1x8x128xbf16>
    tpu.vector_store %arg4[%13, %c0_7, %c0_8], %16 {strides = array<i32>} : memref<8x8x128xbf16, #tpu.memory_space<vmem>>, vector<1x8x128xbf16>,
    %c1_i32 = arith.constant 1 : i32
    %cst_9 = arith.constant dense<0.000000e+00> : vector<8x128xf32>
    %17 = tpu.matmul %12, %3, %cst_9 {dimension_numbers = #tpu.dot_dimension_numbers<[1], [0], [0], [1], [0, 0, 1, 1], [], []>} : vector<8x128xbf16>, vector<128x128xbf16>, vector<8x128xf32> -> vector<8x128xf32>
    %18 = arith.index_cast %c1_i32 : i32 to index
    %c0_10 = arith.constant 0 : index
    %c0_11 = arith.constant 0 : index
    %19 = vector.load %arg1[%18, %c0_10, %c0_11] : memref<8x8x128xbf16, #tpu.memory_space<vmem>>, vector<1x8x128xbf16>
    %20 = vector.shape_cast %19 : vector<1x8x128xbf16> to vector<8x128xbf16>
    %21 = arith.extf %20 : vector<8x128xbf16> to vector<8x128xf32>
    %22 = arith.addf %17, %21 : vector<8x128xf32>
    %23 = math.tanh %22 : vector<8x128xf32>
    %24 = arith.truncf %23 : vector<8x128xf32> to vector<8x128xbf16>
    %25 = arith.index_cast %c1_i32 : i32 to index
    %c0_12 = arith.constant 0 : index
    %c0_13 = arith.constant 0 : index
    %26 = vector.load %arg4[%25, %c0_12, %c0_13] : memref<8x8x128xbf16, #tpu.memory_space<vmem>>, vector<1x8x128xbf16>
    %27 = vector.shape_cast %26 : vector<1x8x128xbf16> to vector<8x128xbf16>
    %28 = vector.shape_cast %24 : vector<8x128xbf16> to vector<1x8x128xbf16>
    tpu.vector_store %arg4[%25, %c0_12, %c0_13], %28 {strides = array<i32>} : memref<8x8x128xbf16, #tpu.memory_space<vmem>>, vector<1x8x128xbf16>,
    %c2_i32 = arith.constant 2 : i32
    %cst_14 = arith.constant dense<0.000000e+00> : vector<8x128xf32>
    %29 = tpu.matmul %24, %3, %cst_14 {dimension_numbers = #tpu.dot_dimension_numbers<[1], [0], [0], [1], [0, 0, 1, 1], [], []>} : vector<8x128xbf16>, vector<128x128xbf16>, vector<8x128xf32> -> vector<8x128xf32>
    %30 = arith.index_cast %c2_i32 : i32 to index
    %c0_15 = arith.constant 0 : index
    %c0_16 = arith.constant 0 : index
    %31 = vector.load %arg1[%30, %c0_15, %c0_16] : memref<8x8x128xbf16, #tpu.memory_space<vmem>>, vector<1x8x128xbf16>
    %32 = vector.shape_cast %31 : vector<1x8x128xbf16> to vector<8x128xbf16>
    %33 = arith.extf %32 : vector<8x128xbf16> to vector<8x128xf32>
    %34 = arith.addf %29, %33 : vector<8x128xf32>
    %35 = math.tanh %34 : vector<8x128xf32>
    %36 = arith.truncf %35 : vector<8x128xf32> to vector<8x128xbf16>
    %37 = arith.index_cast %c2_i32 : i32 to index
    %c0_17 = arith.constant 0 : index
    %c0_18 = arith.constant 0 : index
    %38 = vector.load %arg4[%37, %c0_17, %c0_18] : memref<8x8x128xbf16, #tpu.memory_space<vmem>>, vector<1x8x128xbf16>
    %39 = vector.shape_cast %38 : vector<1x8x128xbf16> to vector<8x128xbf16>
    %40 = vector.shape_cast %36 : vector<8x128xbf16> to vector<1x8x128xbf16>
    tpu.vector_store %arg4[%37, %c0_17, %c0_18], %40 {strides = array<i32>} : memref<8x8x128xbf16, #tpu.memory_space<vmem>>, vector<1x8x128xbf16>,
    %c3_i32 = arith.constant 3 : i32
    %cst_19 = arith.constant dense<0.000000e+00> : vector<8x128xf32>
    %41 = tpu.matmul %36, %3, %cst_19 {dimension_numbers = #tpu.dot_dimension_numbers<[1], [0], [0], [1], [0, 0, 1, 1], [], []>} : vector<8x128xbf16>, vector<128x128xbf16>, vector<8x128xf32> -> vector<8x128xf32>
    %42 = arith.index_cast %c3_i32 : i32 to index
    %c0_20 = arith.constant 0 : index
    %c0_21 = arith.constant 0 : index
    %43 = vector.load %arg1[%42, %c0_20, %c0_21] : memref<8x8x128xbf16, #tpu.memory_space<vmem>>, vector<1x8x128xbf16>
    %44 = vector.shape_cast %43 : vector<1x8x128xbf16> to vector<8x128xbf16>
    %45 = arith.extf %44 : vector<8x128xbf16> to vector<8x128xf32>
    %46 = arith.addf %41, %45 : vector<8x128xf32>
    %47 = math.tanh %46 : vector<8x128xf32>
    %48 = arith.truncf %47 : vector<8x128xf32> to vector<8x128xbf16>
    %49 = arith.index_cast %c3_i32 : i32 to index
    %c0_22 = arith.constant 0 : index
    %c0_23 = arith.constant 0 : index
    %50 = vector.load %arg4[%49, %c0_22, %c0_23] : memref<8x8x128xbf16, #tpu.memory_space<vmem>>, vector<1x8x128xbf16>
    %51 = vector.shape_cast %50 : vector<1x8x128xbf16> to vector<8x128xbf16>
    %52 = vector.shape_cast %48 : vector<8x128xbf16> to vector<1x8x128xbf16>
    tpu.vector_store %arg4[%49, %c0_22, %c0_23], %52 {strides = array<i32>} : memref<8x8x128xbf16, #tpu.memory_space<vmem>>, vector<1x8x128xbf16>,
    %c4_i32 = arith.constant 4 : i32
    %cst_24 = arith.constant dense<0.000000e+00> : vector<8x128xf32>
    %53 = tpu.matmul %48, %3, %cst_24 {dimension_numbers = #tpu.dot_dimension_numbers<[1], [0], [0], [1], [0, 0, 1, 1], [], []>} : vector<8x128xbf16>, vector<128x128xbf16>, vector<8x128xf32> -> vector<8x128xf32>
    %54 = arith.index_cast %c4_i32 : i32 to index
    %c0_25 = arith.constant 0 : index
    %c0_26 = arith.constant 0 : index
    %55 = vector.load %arg1[%54, %c0_25, %c0_26] : memref<8x8x128xbf16, #tpu.memory_space<vmem>>, vector<1x8x128xbf16>
    %56 = vector.shape_cast %55 : vector<1x8x128xbf16> to vector<8x128xbf16>
    %57 = arith.extf %56 : vector<8x128xbf16> to vector<8x128xf32>
    %58 = arith.addf %53, %57 : vector<8x128xf32>
    %59 = math.tanh %58 : vector<8x128xf32>
    %60 = arith.truncf %59 : vector<8x128xf32> to vector<8x128xbf16>
    %61 = arith.index_cast %c4_i32 : i32 to index
    %c0_27 = arith.constant 0 : index
    %c0_28 = arith.constant 0 : index
    %62 = vector.load %arg4[%61, %c0_27, %c0_28] : memref<8x8x128xbf16, #tpu.memory_space<vmem>>, vector<1x8x128xbf16>
    %63 = vector.shape_cast %62 : vector<1x8x128xbf16> to vector<8x128xbf16>
    %64 = vector.shape_cast %60 : vector<8x128xbf16> to vector<1x8x128xbf16>
    tpu.vector_store %arg4[%61, %c0_27, %c0_28], %64 {strides = array<i32>} : memref<8x8x128xbf16, #tpu.memory_space<vmem>>, vector<1x8x128xbf16>,
    %c5_i32 = arith.constant 5 : i32
    %cst_29 = arith.constant dense<0.000000e+00> : vector<8x128xf32>
    %65 = tpu.matmul %60, %3, %cst_29 {dimension_numbers = #tpu.dot_dimension_numbers<[1], [0], [0], [1], [0, 0, 1, 1], [], []>} : vector<8x128xbf16>, vector<128x128xbf16>, vector<8x128xf32> -> vector<8x128xf32>
    %66 = arith.index_cast %c5_i32 : i32 to index
    %c0_30 = arith.constant 0 : index
    %c0_31 = arith.constant 0 : index
    %67 = vector.load %arg1[%66, %c0_30, %c0_31] : memref<8x8x128xbf16, #tpu.memory_space<vmem>>, vector<1x8x128xbf16>
    %68 = vector.shape_cast %67 : vector<1x8x128xbf16> to vector<8x128xbf16>
    %69 = arith.extf %68 : vector<8x128xbf16> to vector<8x128xf32>
    %70 = arith.addf %65, %69 : vector<8x128xf32>
    %71 = math.tanh %70 : vector<8x128xf32>
    %72 = arith.truncf %71 : vector<8x128xf32> to vector<8x128xbf16>
    %73 = arith.index_cast %c5_i32 : i32 to index
    %c0_32 = arith.constant 0 : index
    %c0_33 = arith.constant 0 : index
    %74 = vector.load %arg4[%73, %c0_32, %c0_33] : memref<8x8x128xbf16, #tpu.memory_space<vmem>>, vector<1x8x128xbf16>
    %75 = vector.shape_cast %74 : vector<1x8x128xbf16> to vector<8x128xbf16>
    %76 = vector.shape_cast %72 : vector<8x128xbf16> to vector<1x8x128xbf16>
    tpu.vector_store %arg4[%73, %c0_32, %c0_33], %76 {strides = array<i32>} : memref<8x8x128xbf16, #tpu.memory_space<vmem>>, vector<1x8x128xbf16>,
    %c6_i32 = arith.constant 6 : i32
    %cst_34 = arith.constant dense<0.000000e+00> : vector<8x128xf32>
    %77 = tpu.matmul %72, %3, %cst_34 {dimension_numbers = #tpu.dot_dimension_numbers<[1], [0], [0], [1], [0, 0, 1, 1], [], []>} : vector<8x128xbf16>, vector<128x128xbf16>, vector<8x128xf32> -> vector<8x128xf32>
    %78 = arith.index_cast %c6_i32 : i32 to index
    %c0_35 = arith.constant 0 : index
    %c0_36 = arith.constant 0 : index
    %79 = vector.load %arg1[%78, %c0_35, %c0_36] : memref<8x8x128xbf16, #tpu.memory_space<vmem>>, vector<1x8x128xbf16>
    %80 = vector.shape_cast %79 : vector<1x8x128xbf16> to vector<8x128xbf16>
    %81 = arith.extf %80 : vector<8x128xbf16> to vector<8x128xf32>
    %82 = arith.addf %77, %81 : vector<8x128xf32>
    %83 = math.tanh %82 : vector<8x128xf32>
    %84 = arith.truncf %83 : vector<8x128xf32> to vector<8x128xbf16>
    %85 = arith.index_cast %c6_i32 : i32 to index
    %c0_37 = arith.constant 0 : index
    %c0_38 = arith.constant 0 : index
    %86 = vector.load %arg4[%85, %c0_37, %c0_38] : memref<8x8x128xbf16, #tpu.memory_space<vmem>>, vector<1x8x128xbf16>
    %87 = vector.shape_cast %86 : vector<1x8x128xbf16> to vector<8x128xbf16>
    %88 = vector.shape_cast %84 : vector<8x128xbf16> to vector<1x8x128xbf16>
    tpu.vector_store %arg4[%85, %c0_37, %c0_38], %88 {strides = array<i32>} : memref<8x8x128xbf16, #tpu.memory_space<vmem>>, vector<1x8x128xbf16>,
    %c7_i32 = arith.constant 7 : i32
    %cst_39 = arith.constant dense<0.000000e+00> : vector<8x128xf32>
    %89 = tpu.matmul %84, %3, %cst_39 {dimension_numbers = #tpu.dot_dimension_numbers<[1], [0], [0], [1], [0, 0, 1, 1], [], []>} : vector<8x128xbf16>, vector<128x128xbf16>, vector<8x128xf32> -> vector<8x128xf32>
    %90 = arith.index_cast %c7_i32 : i32 to index
    %c0_40 = arith.constant 0 : index
    %c0_41 = arith.constant 0 : index
    %91 = vector.load %arg1[%90, %c0_40, %c0_41] : memref<8x8x128xbf16, #tpu.memory_space<vmem>>, vector<1x8x128xbf16>
    %92 = vector.shape_cast %91 : vector<1x8x128xbf16> to vector<8x128xbf16>
    %93 = arith.extf %92 : vector<8x128xbf16> to vector<8x128xf32>
    %94 = arith.addf %89, %93 : vector<8x128xf32>
    %95 = math.tanh %94 : vector<8x128xf32>
    %96 = arith.truncf %95 : vector<8x128xf32> to vector<8x128xbf16>
    %97 = arith.index_cast %c7_i32 : i32 to index
    %c0_42 = arith.constant 0 : index
    %c0_43 = arith.constant 0 : index
    %98 = vector.load %arg4[%97, %c0_42, %c0_43] : memref<8x8x128xbf16, #tpu.memory_space<vmem>>, vector<1x8x128xbf16>
    %99 = vector.shape_cast %98 : vector<1x8x128xbf16> to vector<8x128xbf16>
    %100 = vector.shape_cast %96 : vector<8x128xbf16> to vector<1x8x128xbf16>
    tpu.vector_store %arg4[%97, %c0_42, %c0_43], %100 {strides = array<i32>} : memref<8x8x128xbf16, #tpu.memory_space<vmem>>, vector<1x8x128xbf16>,
    %c8_i32 = arith.constant 8 : i32
    %c0_44 = arith.constant 0 : index
    %c0_45 = arith.constant 0 : index
    %101 = vector.load %arg5[%c0_44, %c0_45] : memref<8x128xbf16, #tpu.memory_space<vmem>>, vector<8x128xbf16>
    tpu.vector_store %arg5[%c0_44, %c0_45], %96 {strides = array<i32>} : memref<8x128xbf16, #tpu.memory_space<vmem>>, vector<8x128xbf16>,
    return
  }
  func.func @transform_0(%arg0: i32) -> (i32, i32, i32) {
    %c0_i32 = arith.constant 0 : i32
    %c0_i32_0 = arith.constant 0 : i32
    %c0_i32_1 = arith.constant 0 : i32
    return %arg0, %c0_i32, %c0_i32_0 : i32, i32, i32
  }
  func.func @transform_1(%arg0: i32) -> (i32, i32) {
    %c0_i32 = arith.constant 0 : i32
    %c0_i32_0 = arith.constant 0 : i32
    %c0_i32_1 = arith.constant 0 : i32
    return %c0_i32, %c0_i32_0 : i32, i32
  }
  func.func @transform_2(%arg0: i32) -> (i32, i32) {
    %c0_i32 = arith.constant 0 : i32
    %c0_i32_0 = arith.constant 0 : i32
    %c0_i32_1 = arith.constant 0 : i32
    return %c0_i32, %c0_i32_0 : i32, i32
  }
  func.func @transform_3(%arg0: i32) -> (i32, i32, i32) {
    %c0_i32 = arith.constant 0 : i32
    %c0_i32_0 = arith.constant 0 : i32
    %c0_i32_1 = arith.constant 0 : i32
    return %arg0, %c0_i32, %c0_i32_0 : i32, i32, i32
  }
}

</mosaic_0001>

<llo_original>
// kernel: tpu_custom_call.1
$region0: #{tpu_custom_call.1}
  #allocation0 [shape = 'u32[]', space=smem, size = 0x4, offset = 0x4, fixed_abs, tag = 'smem constant byte address 0x4 - core index']
  #allocation1 [shape = 'u32[144,128]{1,0:T(1,128)}', space=vmem, size = 0x12000, scoped, tag = 'internal scratch']
  #allocation2 [shape = 'bf16[8,128]{1,0:T(8,128)(2,1)}', space=vmem, size = 0x800, scoped, tag = 'scratch operand']
  %s0 = inlined_call_operand.hbm [shape: bf16[16,8,128], index: 0, kind: input, shape index: {}]
  %s1 = inlined_call_operand.hbm [shape: bf16[128,128], index: 1, kind: input, shape index: {}]
  %s2 = inlined_call_operand.hbm [shape: bf16[8,128], index: 2, kind: input, shape index: {}]
  %s3 = inlined_call_operand.hbm [shape: bf16[16,8,128], index: 3, kind: output, shape index: {}]
  %s4 = sld [smem:[#allocation0]]
  $region61: #{tpu_custom_call.1} parent=0
    _
  %s6 = ssub.s32 1, %s4
  %s7 = scalar_select 0, %s6, %s4
  $region1: #{tpu_custom_call.1} parent=0
    #allocation3 [shape = 'u8[32768]{0}', space=vmem, size = 0x8000, scoped, tag = 'input window, operand 0']
    #allocation4 [shape = 's32[2]{0}', space=sflag, size = 0x8, scoped, tag = 'scoped memory for tpu_custom_call.1']
    #allocation5 [shape = 's32[2]{0}', space=sflag, size = 0x8, scoped, tag = 'scoped memory for tpu_custom_call.1']
    #allocation6 [shape = 'u8[32768]{0}', space=vmem, size = 0x8000, scoped, tag = 'input window, operand 1, single buffered']
    #allocation7 [shape = 's32[1]{0}', space=sflag, size = 0x4, scoped, tag = 'scoped memory for tpu_custom_call.1']
    #allocation8 [shape = 'u8[2048]{0}', space=vmem, size = 0x800, scoped, tag = 'input window, operand 2, single buffered']
    #allocation9 [shape = 'u8[32768]{0}', space=vmem, size = 0x8000, scoped, tag = 'output window, operand 0']
    %8 = vsyncpa [#allocation4], 0
    %s9 = scalar_lea.sflag [#allocation4], 1
    %10 = vsyncpa %s9, 0
    %11 = vsyncpa [#allocation7], 0
    %12 = vsyncpa [#allocation5], 0
    %s13 = scalar_lea.sflag [#allocation5], 1
    %14 = vsyncpa %s13, 0
    loop: start=0, step=1, limit=4
    $region2: #{tpu_custom_call.1} parent=1 // loop_pre_header
      _
    $region3: #{tpu_custom_call.1} parent=1 // loop_header
      %s16 = sphi 0, %s20
      %p17 = scmp.ge.s32.totalorder %s16, 4
      %s26 = sphi 0, %s28
      %s29 = sphi 0, %s26
      %s30 = sphi 0, %s29
      %s46 = sphi 0, %s30
      %s50 = sphi 0, %s50
      %s52 = sphi 0, %s50
      %s53 = sphi 0, %s52
      %s67 = sphi 0, %s53
      %s71 = sphi 0, %s71
      %s73 = sphi 0, %s71
      %s74 = sphi 0, %s73
      %s88 = sphi 0, %s74
      %s94 = sphi 0, %s96
      %s97 = sphi 0, %s94
      %s98 = sphi 0, %s97
      %s114 = sphi 0, %s98
    $region4: #{tpu_custom_call.1} parent=1 // loop_header_branch
      %19 = sbr.rel (%p17) target = $region8
    $region5: #{tpu_custom_call.1} parent=1 // loop_body
      %s21 = ssub.s32 %s16, 1
      %s22 = ssub.s32 %s16, 2
      %s23 = sadd.s32 %s16, 1
      %s24 = ssub.s32 %s16, %s23
      %p25 = scmp.eq.s32.totalorder %s24, 0
      %s27 = sadd.s32 %s26, 1
      %s28 = scalar_select %p25, %s26, %s27
      %p31 = pneg %p25
      %p32 = scmp.eq.s32.totalorder %s16, 1
      %p33 = por %p31, %p32
      %p34 = scmp.ne.s32.totalorder %s26, %s29
      %p35 = scmp.eq.s32.totalorder %s16, 0
      %p36 = por %p34, %p35
      %p37 = scmp.ne.s32.totalorder %s26, %s29
      %p38 = scmp.eq.s32.totalorder %s21, 1
      %p39 = por %p37, %p38
      %p40 = scmp.ne.s32.totalorder %s29, %s30
      %p41 = scmp.eq.s32.totalorder %s21, 0
      %p42 = por %p40, %p41
      %p43 = scmp.ne.s32.totalorder %s29, %s30
      %p44 = scmp.eq.s32.totalorder %s22, 1
      %p45 = por %p43, %p44
      %p47 = scmp.ne.s32.totalorder %s30, %s46
      %p48 = scmp.eq.s32.totalorder %s22, 0
      %p49 = por %p47, %p48
      %s51 = sadd.s32 %s50, 1
      %p54 = scmp.eq.s32.totalorder %s16, 1
      %p55 = scmp.ne.s32.totalorder %s50, %s52
      %p56 = scmp.eq.s32.totalorder %s16, 0
      %p57 = por %p55, %p56
      %p58 = scmp.ne.s32.totalorder %s50, %s52
      %p59 = scmp.eq.s32.totalorder %s21, 1
      %p60 = por %p58, %p59
      %p61 = scmp.ne.s32.totalorder %s52, %s53
      %p62 = scmp.eq.s32.totalorder %s21, 0
      %p63 = por %p61, %p62
      %p64 = scmp.ne.s32.totalorder %s52, %s53
      %p65 = scmp.eq.s32.totalorder %s22, 1
      %p66 = por %p64, %p65
      %p68 = scmp.ne.s32.totalorder %s53, %s67
      %p69 = scmp.eq.s32.totalorder %s22, 0
      %p70 = por %p68, %p69
      %s72 = sadd.s32 %s71, 1
      %p75 = scmp.eq.s32.totalorder %s16, 1
      %p76 = scmp.ne.s32.totalorder %s71, %s73
      %p77 = scmp.eq.s32.totalorder %s16, 0
      %p78 = por %p76, %p77
      %p79 = scmp.ne.s32.totalorder %s71, %s73
      %p80 = scmp.eq.s32.totalorder %s21, 1
      %p81 = por %p79, %p80
      %p82 = scmp.ne.s32.totalorder %s73, %s74
      %p83 = scmp.eq.s32.totalorder %s21, 0
      %p84 = por %p82, %p83
      %p85 = scmp.ne.s32.totalorder %s73, %s74
      %p86 = scmp.eq.s32.totalorder %s22, 1
      %p87 = por %p85, %p86
      %p89 = scmp.ne.s32.totalorder %s74, %s88
      %p90 = scmp.eq.s32.totalorder %s22, 0
      %p91 = por %p89, %p90
      %s92 = ssub.s32 %s16, %s23
      %p93 = scmp.eq.s32.totalorder %s92, 0
      %s95 = sadd.s32 %s94, 1
      %s96 = scalar_select %p93, %s94, %s95
      %p99 = pneg %p93
      %p100 = scmp.eq.s32.totalorder %s16, 1
      %p101 = por %p99, %p100
      %p102 = scmp.ne.s32.totalorder %s94, %s97
      %p103 = scmp.eq.s32.totalorder %s16, 0
      %p104 = por %p102, %p103
      %p105 = scmp.ne.s32.totalorder %s94, %s97
      %p106 = scmp.eq.s32.totalorder %s21, 1
      %p107 = por %p105, %p106
      %p108 = scmp.ne.s32.totalorder %s97, %s98
      %p109 = scmp.eq.s32.totalorder %s21, 0
      %p110 = por %p108, %p109
      %p111 = scmp.ne.s32.totalorder %s97, %s98
      %p112 = scmp.eq.s32.totalorder %s22, 1
      %p113 = por %p111, %p112
      %p115 = scmp.ne.s32.totalorder %s98, %s114
      %p116 = scmp.eq.s32.totalorder %s22, 0
      %p117 = por %p115, %p116
      %p118 = scmp.le.s32.totalorder 1, %s16
      %p119 = scmp.lt.s32.totalorder %s16, 3
      %p120 = pnand %p118, %p119
      %p121 = pneg %p120
      // Predicated region
      $region9: #{tpu_custom_call.1} parent=5 // pred_check
        _
      $region10: #{tpu_custom_call.1} parent=5 // pred_check_branch
        %123 = sbr.rel (%p120) target = $region12
      $region11: #{tpu_custom_call.1} parent=5 // pred_region
        %s124 = ssub.s32 %s16, 1
        // Predicated region
        $region13: #{tpu_custom_call.1} parent=11 // pred_check
          %p125 = pneg %p63
        $region14: #{tpu_custom_call.1} parent=11 // pred_check_branch
          %127 = sbr.rel (%p125) target = $region16
        $region15: #{tpu_custom_call.1} parent=11 // pred_region
          %s129 = ssub.s32 1024, 1024
          %130 = vsyncadd [#allocation7], %s129
          %s131 = sshll.u32 [#allocation6], 4
          %s132 = int_to_ptr.vmem [resolvable:$true] %s131
          %137 = dma.hbm_to_vmem [thread:$0]  %s1, 1024, %s132, [#allocation7], 64, 64, 4
        $region16: #{tpu_custom_call.1} parent=11 // pred_fallthru
          _
        // Predicated region
        $region17: #{tpu_custom_call.1} parent=11 // pred_check
          %p138 = pneg %p84
        $region18: #{tpu_custom_call.1} parent=11 // pred_check_branch
          %140 = sbr.rel (%p138) target = $region20
        $region19: #{tpu_custom_call.1} parent=11 // pred_region
          %s142 = ssub.s32 64, 64
          %143 = vsyncadd [#allocation7], %s142
          %s145 = sshll.u32 [#allocation8], 4
          %s146 = int_to_ptr.vmem [resolvable:$true] %s145
          %148 = dma.hbm_to_vmem [thread:$0]  %s2, 64, %s146, [#allocation7]
        $region20: #{tpu_custom_call.1} parent=11 // pred_fallthru
          _
      $region12: #{tpu_custom_call.1} parent=5 // pred_fallthru
        _
      %p149 = scmp.lt.s32.totalorder %s16, 2
      // Predicated region
      $region21: #{tpu_custom_call.1} parent=5 // pred_check
        %p150 = pneg %p149
      $region22: #{tpu_custom_call.1} parent=5 // pred_check_branch
        %152 = sbr.rel (%p150) target = $region24
      $region23: #{tpu_custom_call.1} parent=5 // pred_region
        // Predicated region
        $region25: #{tpu_custom_call.1} parent=23 // pred_check
          %p153 = pneg %p36
        $region26: #{tpu_custom_call.1} parent=23 // pred_check_branch
          %155 = sbr.rel (%p153) target = $region28
        $region27: #{tpu_custom_call.1} parent=23 // pred_region
          %s156 = sand.u32 %s26, 1
          %s157 = scalar_lea.sflag [#allocation4], %s156
          %s158 = sand.u32 %s26, 1
          %s159 = smul.addr %s158, 32
          %s160 = scalar_lea.vmem [#allocation3], %s159
          %s161 = smul.u32 8, %s16
          %s163 = ssub.s32 512, 512
          %164 = vsyncadd %s157, %s163
          %s165 = smul.addr %s161, 64
          %s166 = scalar_lea.hbm %s0, %s165
          %s167 = sshll.u32 %s160, 4
          %s168 = int_to_ptr.vmem [resolvable:$true] %s167
          %173 = dma.hbm_to_vmem [thread:$0]  %s166, 512, %s168, %s157, 64, 64, 4
        $region28: #{tpu_custom_call.1} parent=23 // pred_fallthru
          _
      $region24: #{tpu_custom_call.1} parent=5 // pred_fallthru
        _
      %p174 = scmp.le.s32.totalorder 1, %s16
      %p175 = scmp.lt.s32.totalorder %s16, 3
      %p176 = pnand %p174, %p175
      %p177 = pneg %p176
      // Predicated region
      $region29: #{tpu_custom_call.1} parent=5 // pred_check
        _
      $region30: #{tpu_custom_call.1} parent=5 // pred_check_branch
        %179 = sbr.rel (%p176) target = $region32
      $region31: #{tpu_custom_call.1} parent=5 // pred_region
        %s180 = ssub.s32 %s16, 1
        %s181 = sand.u32 %s29, 1
        %s182 = scalar_lea.sflag [#allocation4], %s181
        %s183 = sand.u32 %s29, 1
        %s184 = smul.addr %s183, 32
        %s185 = scalar_lea.vmem [#allocation3], %s184
        // Predicated region
        $region33: #{tpu_custom_call.1} parent=31 // pred_check
          %p186 = pneg %p42
        $region34: #{tpu_custom_call.1} parent=31 // pred_check_branch
          %188 = sbr.rel (%p186) target = $region36
        $region35: #{tpu_custom_call.1} parent=31 // pred_region
          %189 = dma.done %s182, 512
        $region36: #{tpu_custom_call.1} parent=31 // pred_fallthru
          _
        // Predicated region
        $region37: #{tpu_custom_call.1} parent=31 // pred_check
          %p190 = pneg %p63
        $region38: #{tpu_custom_call.1} parent=31 // pred_check_branch
          %192 = sbr.rel (%p190) target = $region40
        $region39: #{tpu_custom_call.1} parent=31 // pred_region
          %193 = dma.done [#allocation7], 1024
        $region40: #{tpu_custom_call.1} parent=31 // pred_fallthru
          _
        // Predicated region
        $region41: #{tpu_custom_call.1} parent=31 // pred_check
          %p194 = pneg %p84
        $region42: #{tpu_custom_call.1} parent=31 // pred_check_branch
          %196 = sbr.rel (%p194) target = $region44
        $region43: #{tpu_custom_call.1} parent=31 // pred_region
          %197 = dma.done [#allocation7], 64
        $region44: #{tpu_custom_call.1} parent=31 // pred_fallthru
          _
        %s198 = sand.u32 %s29, 1
        %s199 = scalar_lea.sflag [#allocation4], %s198
        %s200 = sand.u32 %s29, 1
        %s201 = smul.addr %s200, 32
        %s202 = scalar_lea.vmem [#allocation3], %s201
        %p203 = pneg %p42
        %p204 = pneg %p39
        %p205 = pneg %p63
        %p206 = pneg %p60
        %p207 = pneg %p84
        %p208 = pneg %p81
        %p209 = pneg %p110
        %p210 = pneg %p107
        %s211 = sand.u32 %s97, 1
        %s212 = scalar_lea.sflag [#allocation5], %s211
        %s213 = sand.u32 %s97, 1
        %s214 = smul.addr %s213, 32
        %s215 = scalar_lea.vmem [#allocation9], %s214
        %s216 = smul.u32 8, %s21
        %s217 = smul.u32 8, %s21
        %p219 = scmp.eq.s32.totalorder %s21, 0
        // Predicated region
        $region45: #{tpu_custom_call.1} parent=31 // pred_check
          %p220 = pneg %p219
        $region46: #{tpu_custom_call.1} parent=31 // pred_check_branch
          %222 = sbr.rel (%p220) target = $region48
        $region47: #{tpu_custom_call.1} parent=31 // pred_region
          %v223 = vld [vmem:[#allocation8] sm:$0xf]
          %224 = vst [vmem:[#allocation2] sm:$0xf] %v223
        $region48: #{tpu_custom_call.1} parent=31 // pred_fallthru
          _
        %v225 = vld [vmem:[#allocation6] sm:$0xf]
        %v226 = vld [vmem:[#allocation6 + $0x4] sm:$0xf]
        %v227 = vld [vmem:[#allocation6 + $0x8] sm:$0xf]
        %v228 = vld [vmem:[#allocation6 + $0xc] sm:$0xf]
        %v229 = vld [vmem:[#allocation6 + $0x10] sm:$0xf]
        %v230 = vld [vmem:[#allocation6 + $0x14] sm:$0xf]
        %v231 = vld [vmem:[#allocation6 + $0x18] sm:$0xf]
        %v232 = vld [vmem:[#allocation6 + $0x1c] sm:$0xf]
        %v233 = vld [vmem:[#allocation6 + $0x20] sm:$0xf]
        %v234 = vld [vmem:[#allocation6 + $0x24] sm:$0xf]
        %v235 = vld [vmem:[#allocation6 + $0x28] sm:$0xf]
        %v236 = vld [vmem:[#allocation6 + $0x2c] sm:$0xf]
        %v237 = vld [vmem:[#allocation6 + $0x30] sm:$0xf]
        %v238 = vld [vmem:[#allocation6 + $0x34] sm:$0xf]
        %v239 = vld [vmem:[#allocation6 + $0x38] sm:$0xf]
        %v240 = vld [vmem:[#allocation6 + $0x3c] sm:$0xf]
        %v241 = vld [vmem:[#allocation2] sm:$0xf]
        %v242 = vld [vmem:[%s185] sm:$0xf]
        %v243 = vunpack.c.l.bf16 %v242
        %v260 = vunpack.c.l.b16 %v225
        %v261 = vunpack.c.l.b16 %v226
        %v262 = vunpack.c.l.b16 %v227
        %v263 = vunpack.c.l.b16 %v228
        %v264 = vunpack.c.l.b16 %v229
        %v265 = vunpack.c.l.b16 %v230
        %v266 = vunpack.c.l.b16 %v231
        %v267 = vunpack.c.l.b16 %v232
        %v268 = vunpack.c.l.b16 %v233
        %v269 = vunpack.c.l.b16 %v234
        %v270 = vunpack.c.l.b16 %v235
        %v271 = vunpack.c.l.b16 %v236
        %v272 = vunpack.c.l.b16 %v237
        %v273 = vunpack.c.l.b16 %v238
        %v274 = vunpack.c.l.b16 %v239
        %v275 = vunpack.c.l.b16 %v240
        %v276 = vpack.c.b16 %v261, %v260
        %v277 = vpack.c.b16 %v263, %v262
        %v278 = vpack.c.b16 %v265, %v264
        %v279 = vpack.c.b16 %v267, %v266
        %v280 = vpack.c.b16 %v269, %v268
        %v281 = vpack.c.b16 %v271, %v270
        %v282 = vpack.c.b16 %v273, %v272
        %v283 = vpack.c.b16 %v275, %v274
        %292 = vmatprep.subr.bf16.mxu0 0
        %293 = vmatpush1.bf16.msra.mxu0 %v283
        %294 = vmatprep.subr.bf16.mxu0 0
        %295 = vmatpush1.bf16.msra.mxu0 %v282
        %296 = vmatprep.subr.bf16.mxu0 0
        %297 = vmatpush1.bf16.msra.mxu0 %v281
        %298 = vmatprep.subr.bf16.mxu0 0
        %299 = vmatpush1.bf16.msra.mxu0 %v280
        %300 = vmatprep.subr.bf16.mxu0 0
        %301 = vmatpush1.bf16.msra.mxu0 %v279
        %302 = vmatprep.subr.bf16.mxu0 0
        %303 = vmatpush1.bf16.msra.mxu0 %v278
        %304 = vmatprep.subr.bf16.mxu0 0
        %305 = vmatpush1.bf16.msra.mxu0 %v277
        %306 = vmatprep.subr.bf16.mxu0 0
        %307 = vmatpush1.bf16.msra.mxu0 %v276
        %308 = vmatprep.subr.bf16.mxu0 0
        %309 = vmatpush2.bf16.msra.mxu0 0
        %310 = vmatprep.subr.bf16.mxu0 0
        %311 = vmatpush2.bf16.msra.mxu0 0
        %312 = vmatprep.subr.bf16.mxu0 0
        %313 = vmatpush2.bf16.msra.mxu0 0
        %314 = vmatprep.subr.bf16.mxu0 0
        %315 = vmatpush2.bf16.msra.mxu0 0
        %316 = vmatprep.subr.bf16.mxu0 0
        %317 = vmatpush2.bf16.msra.mxu0 0
        %318 = vmatprep.subr.bf16.mxu0 0
        %319 = vmatpush2.bf16.msra.mxu0 0
        %320 = vmatprep.subr.bf16.mxu0 0
        %321 = vmatpush2.bf16.msra.mxu0 0
        %322 = vmatprep.subr.bf16.mxu0 0
        %323 = vmatpush2.bf16.msra.mxu0 0
        %324 = vmatprep.mubr.bf16.mxu0 0
        %325 = vmatmul.mubr.bf16.gmra.mxu0 %v241
        %v326 = vpop.f32.mrf.mxu0
        %v327 = vadd.f32 %v243, %v326
        %v328 = vpop.f32.mrf.mxu0
        %v329 = vpop.f32.mrf.mxu0
        %v330 = vpop.f32.mrf.mxu0
        %331 = vdwg.mxu0
        %v332 = vtanh.pop %v327
        %v333 = vpack.c.bf16 %v332, %v332
        %334 = vst [vmem:[%s215] sm:$0xf] %v333
        %s335 = scalar_lea.vmem %s185, 4 [#allocation3]
        %v336 = vld [vmem:[%s335] sm:$0xf]
        %v337 = vunpack.c.l.bf16 %v336
        %338 = vmatprep.subr.bf16.mxu0 0
        %339 = vmatpush1.bf16.msra.mxu0 %v283
        %340 = vmatprep.subr.bf16.mxu0 0
        %341 = vmatpush1.bf16.msra.mxu0 %v282
        %342 = vmatprep.subr.bf16.mxu0 0
        %343 = vmatpush1.bf16.msra.mxu0 %v281
        %344 = vmatprep.subr.bf16.mxu0 0
        %345 = vmatpush1.bf16.msra.mxu0 %v280
        %346 = vmatprep.subr.bf16.mxu0 0
        %347 = vmatpush1.bf16.msra.mxu0 %v279
        %348 = vmatprep.subr.bf16.mxu0 0
        %349 = vmatpush1.bf16.msra.mxu0 %v278
        %350 = vmatprep.subr.bf16.mxu0 0
        %351 = vmatpush1.bf16.msra.mxu0 %v277
        %352 = vmatprep.subr.bf16.mxu0 0
        %353 = vmatpush1.bf16.msra.mxu0 %v276
        %354 = vmatprep.subr.bf16.mxu0 0
        %355 = vmatpush2.bf16.msra.mxu0 0
        %356 = vmatprep.subr.bf16.mxu0 0
        %357 = vmatpush2.bf16.msra.mxu0 0
        %358 = vmatprep.subr.bf16.mxu0 0
        %359 = vmatpush2.bf16.msra.mxu0 0
        %360 = vmatprep.subr.bf16.mxu0 0
        %361 = vmatpush2.bf16.msra.mxu0 0
        %362 = vmatprep.subr.bf16.mxu0 0
        %363 = vmatpush2.bf16.msra.mxu0 0
        %364 = vmatprep.subr.bf16.mxu0 0
        %365 = vmatpush2.bf16.msra.mxu0 0
        %366 = vmatprep.subr.bf16.mxu0 0
        %367 = vmatpush2.bf16.msra.mxu0 0
        %368 = vmatprep.subr.bf16.mxu0 0
        %369 = vmatpush2.bf16.msra.mxu0 0
        %370 = vmatprep.mubr.bf16.mxu0 0
        %371 = vmatmul.mubr.bf16.gmra.mxu0 %v333
        %v372 = vpop.f32.mrf.mxu0
        %v373 = vadd.f32 %v337, %v372
        %v374 = vpop.f32.mrf.mxu0
        %v375 = vpop.f32.mrf.mxu0
        %v376 = vpop.f32.mrf.mxu0
        %377 = vdwg.mxu0
        %v378 = vtanh.pop %v373
        %v379 = vpack.c.bf16 %v378, %v378
        %s380 = scalar_lea.vmem %s215, 4 [#allocation9]
        %381 = vst [vmem:[%s380] sm:$0xf] %v379
        %s382 = scalar_lea.vmem %s185, 8 [#allocation3]
        %v383 = vld [vmem:[%s382] sm:$0xf]
        %v384 = vunpack.c.l.bf16 %v383
        %385 = vmatprep.subr.bf16.mxu0 0
        %386 = vmatpush1.bf16.msra.mxu0 %v283
        %387 = vmatprep.subr.bf16.mxu0 0
        %388 = vmatpush1.bf16.msra.mxu0 %v282
        %389 = vmatprep.subr.bf16.mxu0 0
        %390 = vmatpush1.bf16.msra.mxu0 %v281
        %391 = vmatprep.subr.bf16.mxu0 0
        %392 = vmatpush1.bf16.msra.mxu0 %v280
        %393 = vmatprep.subr.bf16.mxu0 0
        %394 = vmatpush1.bf16.msra.mxu0 %v279
        %395 = vmatprep.subr.bf16.mxu0 0
        %396 = vmatpush1.bf16.msra.mxu0 %v278
        %397 = vmatprep.subr.bf16.mxu0 0
        %398 = vmatpush1.bf16.msra.mxu0 %v277
        %399 = vmatprep.subr.bf16.mxu0 0
        %400 = vmatpush1.bf16.msra.mxu0 %v276
        %401 = vmatprep.subr.bf16.mxu0 0
        %402 = vmatpush2.bf16.msra.mxu0 0
        %403 = vmatprep.subr.bf16.mxu0 0
        %404 = vmatpush2.bf16.msra.mxu0 0
        %405 = vmatprep.subr.bf16.mxu0 0
        %406 = vmatpush2.bf16.msra.mxu0 0
        %407 = vmatprep.subr.bf16.mxu0 0
        %408 = vmatpush2.bf16.msra.mxu0 0
        %409 = vmatprep.subr.bf16.mxu0 0
        %410 = vmatpush2.bf16.msra.mxu0 0
        %411 = vmatprep.subr.bf16.mxu0 0
        %412 = vmatpush2.bf16.msra.mxu0 0
        %413 = vmatprep.subr.bf16.mxu0 0
        %414 = vmatpush2.bf16.msra.mxu0 0
        %415 = vmatprep.subr.bf16.mxu0 0
        %416 = vmatpush2.bf16.msra.mxu0 0
        %417 = vmatprep.mubr.bf16.mxu0 0
        %418 = vmatmul.mubr.bf16.gmra.mxu0 %v379
        %v419 = vpop.f32.mrf.mxu0
        %v420 = vadd.f32 %v384, %v419
        %v421 = vpop.f32.mrf.mxu0
        %v422 = vpop.f32.mrf.mxu0
        %v423 = vpop.f32.mrf.mxu0
        %424 = vdwg.mxu0
        %v425 = vtanh.pop %v420
        %v426 = vpack.c.bf16 %v425, %v425
        %s427 = scalar_lea.vmem %s215, 8 [#allocation9]
        %428 = vst [vmem:[%s427] sm:$0xf] %v426
        %s429 = scalar_lea.vmem %s185, 12 [#allocation3]
        %v430 = vld [vmem:[%s429] sm:$0xf]
        %v431 = vunpack.c.l.bf16 %v430
        %432 = vmatprep.subr.bf16.mxu0 0
        %433 = vmatpush1.bf16.msra.mxu0 %v283
        %434 = vmatprep.subr.bf16.mxu0 0
        %435 = vmatpush1.bf16.msra.mxu0 %v282
        %436 = vmatprep.subr.bf16.mxu0 0
        %437 = vmatpush1.bf16.msra.mxu0 %v281
        %438 = vmatprep.subr.bf16.mxu0 0
        %439 = vmatpush1.bf16.msra.mxu0 %v280
        %440 = vmatprep.subr.bf16.mxu0 0
        %441 = vmatpush1.bf16.msra.mxu0 %v279
        %442 = vmatprep.subr.bf16.mxu0 0
        %443 = vmatpush1.bf16.msra.mxu0 %v278
        %444 = vmatprep.subr.bf16.mxu0 0
        %445 = vmatpush1.bf16.msra.mxu0 %v277
        %446 = vmatprep.subr.bf16.mxu0 0
        %447 = vmatpush1.bf16.msra.mxu0 %v276
        %448 = vmatprep.subr.bf16.mxu0 0
        %449 = vmatpush2.bf16.msra.mxu0 0
        %450 = vmatprep.subr.bf16.mxu0 0
        %451 = vmatpush2.bf16.msra.mxu0 0
        %452 = vmatprep.subr.bf16.mxu0 0
        %453 = vmatpush2.bf16.msra.mxu0 0
        %454 = vmatprep.subr.bf16.mxu0 0
        %455 = vmatpush2.bf16.msra.mxu0 0
        %456 = vmatprep.subr.bf16.mxu0 0
        %457 = vmatpush2.bf16.msra.mxu0 0
        %458 = vmatprep.subr.bf16.mxu0 0
        %459 = vmatpush2.bf16.msra.mxu0 0
        %460 = vmatprep.subr.bf16.mxu0 0
        %461 = vmatpush2.bf16.msra.mxu0 0
        %462 = vmatprep.subr.bf16.mxu0 0
        %463 = vmatpush2.bf16.msra.mxu0 0
        %464 = vmatprep.mubr.bf16.mxu0 0
        %465 = vmatmul.mubr.bf16.gmra.mxu0 %v426
        %v466 = vpop.f32.mrf.mxu0
        %v467 = vadd.f32 %v431, %v466
        %v468 = vpop.f32.mrf.mxu0
        %v469 = vpop.f32.mrf.mxu0
        %v470 = vpop.f32.mrf.mxu0
        %471 = vdwg.mxu0
        %v472 = vtanh.pop %v467
        %v473 = vpack.c.bf16 %v472, %v472
        %s474 = scalar_lea.vmem %s215, 12 [#allocation9]
        %475 = vst [vmem:[%s474] sm:$0xf] %v473
        %s476 = scalar_lea.vmem %s185, 16 [#allocation3]
        %v477 = vld [vmem:[%s476] sm:$0xf]
        %v478 = vunpack.c.l.bf16 %v477
        %479 = vmatprep.subr.bf16.mxu0 0
        %480 = vmatpush1.bf16.msra.mxu0 %v283
        %481 = vmatprep.subr.bf16.mxu0 0
        %482 = vmatpush1.bf16.msra.mxu0 %v282
        %483 = vmatprep.subr.bf16.mxu0 0
        %484 = vmatpush1.bf16.msra.mxu0 %v281
        %485 = vmatprep.subr.bf16.mxu0 0
        %486 = vmatpush1.bf16.msra.mxu0 %v280
        %487 = vmatprep.subr.bf16.mxu0 0
        %488 = vmatpush1.bf16.msra.mxu0 %v279
        %489 = vmatprep.subr.bf16.mxu0 0
        %490 = vmatpush1.bf16.msra.mxu0 %v278
        %491 = vmatprep.subr.bf16.mxu0 0
        %492 = vmatpush1.bf16.msra.mxu0 %v277
        %493 = vmatprep.subr.bf16.mxu0 0
        %494 = vmatpush1.bf16.msra.mxu0 %v276
        %495 = vmatprep.subr.bf16.mxu0 0
        %496 = vmatpush2.bf16.msra.mxu0 0
        %497 = vmatprep.subr.bf16.mxu0 0
        %498 = vmatpush2.bf16.msra.mxu0 0
        %499 = vmatprep.subr.bf16.mxu0 0
        %500 = vmatpush2.bf16.msra.mxu0 0
        %501 = vmatprep.subr.bf16.mxu0 0
        %502 = vmatpush2.bf16.msra.mxu0 0
        %503 = vmatprep.subr.bf16.mxu0 0
        %504 = vmatpush2.bf16.msra.mxu0 0
        %505 = vmatprep.subr.bf16.mxu0 0
        %506 = vmatpush2.bf16.msra.mxu0 0
        %507 = vmatprep.subr.bf16.mxu0 0
        %508 = vmatpush2.bf16.msra.mxu0 0
        %509 = vmatprep.subr.bf16.mxu0 0
        %510 = vmatpush2.bf16.msra.mxu0 0
        %511 = vmatprep.mubr.bf16.mxu0 0
        %512 = vmatmul.mubr.bf16.gmra.mxu0 %v473
        %v513 = vpop.f32.mrf.mxu0
        %v514 = vadd.f32 %v478, %v513
        %v515 = vpop.f32.mrf.mxu0
        %v516 = vpop.f32.mrf.mxu0
        %v517 = vpop.f32.mrf.mxu0
        %518 = vdwg.mxu0
        %v519 = vtanh.pop %v514
        %v520 = vpack.c.bf16 %v519, %v519
        %s521 = scalar_lea.vmem %s215, 16 [#allocation9]
        %522 = vst [vmem:[%s521] sm:$0xf] %v520
        %s523 = scalar_lea.vmem %s185, 20 [#allocation3]
        %v524 = vld [vmem:[%s523] sm:$0xf]
        %v525 = vunpack.c.l.bf16 %v524
        %526 = vmatprep.subr.bf16.mxu0 0
        %527 = vmatpush1.bf16.msra.mxu0 %v283
        %528 = vmatprep.subr.bf16.mxu0 0
        %529 = vmatpush1.bf16.msra.mxu0 %v282
        %530 = vmatprep.subr.bf16.mxu0 0
        %531 = vmatpush1.bf16.msra.mxu0 %v281
        %532 = vmatprep.subr.bf16.mxu0 0
        %533 = vmatpush1.bf16.msra.mxu0 %v280
        %534 = vmatprep.subr.bf16.mxu0 0
        %535 = vmatpush1.bf16.msra.mxu0 %v279
        %536 = vmatprep.subr.bf16.mxu0 0
        %537 = vmatpush1.bf16.msra.mxu0 %v278
        %538 = vmatprep.subr.bf16.mxu0 0
        %539 = vmatpush1.bf16.msra.mxu0 %v277
        %540 = vmatprep.subr.bf16.mxu0 0
        %541 = vmatpush1.bf16.msra.mxu0 %v276
        %542 = vmatprep.subr.bf16.mxu0 0
        %543 = vmatpush2.bf16.msra.mxu0 0
        %544 = vmatprep.subr.bf16.mxu0 0
        %545 = vmatpush2.bf16.msra.mxu0 0
        %546 = vmatprep.subr.bf16.mxu0 0
        %547 = vmatpush2.bf16.msra.mxu0 0
        %548 = vmatprep.subr.bf16.mxu0 0
        %549 = vmatpush2.bf16.msra.mxu0 0
        %550 = vmatprep.subr.bf16.mxu0 0
        %551 = vmatpush2.bf16.msra.mxu0 0
        %552 = vmatprep.subr.bf16.mxu0 0
        %553 = vmatpush2.bf16.msra.mxu0 0
        %554 = vmatprep.subr.bf16.mxu0 0
        %555 = vmatpush2.bf16.msra.mxu0 0
        %556 = vmatprep.subr.bf16.mxu0 0
        %557 = vmatpush2.bf16.msra.mxu0 0
        %558 = vmatprep.mubr.bf16.mxu0 0
        %559 = vmatmul.mubr.bf16.gmra.mxu0 %v520
        %v560 = vpop.f32.mrf.mxu0
        %v561 = vadd.f32 %v525, %v560
        %v562 = vpop.f32.mrf.mxu0
        %v563 = vpop.f32.mrf.mxu0
        %v564 = vpop.f32.mrf.mxu0
        %565 = vdwg.mxu0
        %v566 = vtanh.pop %v561
        %v567 = vpack.c.bf16 %v566, %v566
        %s568 = scalar_lea.vmem %s215, 20 [#allocation9]
        %569 = vst [vmem:[%s568] sm:$0xf] %v567
        %s570 = scalar_lea.vmem %s185, 24 [#allocation3]
        %v571 = vld [vmem:[%s570] sm:$0xf]
        %v572 = vunpack.c.l.bf16 %v571
        %573 = vmatprep.subr.bf16.mxu0 0
        %574 = vmatpush1.bf16.msra.mxu0 %v283
        %575 = vmatprep.subr.bf16.mxu0 0
        %576 = vmatpush1.bf16.msra.mxu0 %v282
        %577 = vmatprep.subr.bf16.mxu0 0
        %578 = vmatpush1.bf16.msra.mxu0 %v281
        %579 = vmatprep.subr.bf16.mxu0 0
        %580 = vmatpush1.bf16.msra.mxu0 %v280
        %581 = vmatprep.subr.bf16.mxu0 0
        %582 = vmatpush1.bf16.msra.mxu0 %v279
        %583 = vmatprep.subr.bf16.mxu0 0
        %584 = vmatpush1.bf16.msra.mxu0 %v278
        %585 = vmatprep.subr.bf16.mxu0 0
        %586 = vmatpush1.bf16.msra.mxu0 %v277
        %587 = vmatprep.subr.bf16.mxu0 0
        %588 = vmatpush1.bf16.msra.mxu0 %v276
        %589 = vmatprep.subr.bf16.mxu0 0
        %590 = vmatpush2.bf16.msra.mxu0 0
        %591 = vmatprep.subr.bf16.mxu0 0
        %592 = vmatpush2.bf16.msra.mxu0 0
        %593 = vmatprep.subr.bf16.mxu0 0
        %594 = vmatpush2.bf16.msra.mxu0 0
        %595 = vmatprep.subr.bf16.mxu0 0
        %596 = vmatpush2.bf16.msra.mxu0 0
        %597 = vmatprep.subr.bf16.mxu0 0
        %598 = vmatpush2.bf16.msra.mxu0 0
        %599 = vmatprep.subr.bf16.mxu0 0
        %600 = vmatpush2.bf16.msra.mxu0 0
        %601 = vmatprep.subr.bf16.mxu0 0
        %602 = vmatpush2.bf16.msra.mxu0 0
        %603 = vmatprep.subr.bf16.mxu0 0
        %604 = vmatpush2.bf16.msra.mxu0 0
        %605 = vmatprep.mubr.bf16.mxu0 0
        %606 = vmatmul.mubr.bf16.gmra.mxu0 %v567
        %v607 = vpop.f32.mrf.mxu0
        %v608 = vadd.f32 %v572, %v607
        %v609 = vpop.f32.mrf.mxu0
        %v610 = vpop.f32.mrf.mxu0
        %v611 = vpop.f32.mrf.mxu0
        %612 = vdwg.mxu0
        %v613 = vtanh.pop %v608
        %v614 = vpack.c.bf16 %v613, %v613
        %s615 = scalar_lea.vmem %s215, 24 [#allocation9]
        %616 = vst [vmem:[%s615] sm:$0xf] %v614
        %s617 = scalar_lea.vmem %s185, 28 [#allocation3]
        %v618 = vld [vmem:[%s617] sm:$0xf]
        %v619 = vunpack.c.l.bf16 %v618
        %620 = vmatprep.subr.bf16.mxu0 0
        %621 = vmatpush1.bf16.msra.mxu0 %v283
        %622 = vmatprep.subr.bf16.mxu0 0
        %623 = vmatpush1.bf16.msra.mxu0 %v282
        %624 = vmatprep.subr.bf16.mxu0 0
        %625 = vmatpush1.bf16.msra.mxu0 %v281
        %626 = vmatprep.subr.bf16.mxu0 0
        %627 = vmatpush1.bf16.msra.mxu0 %v280
        %628 = vmatprep.subr.bf16.mxu0 0
        %629 = vmatpush1.bf16.msra.mxu0 %v279
        %630 = vmatprep.subr.bf16.mxu0 0
        %631 = vmatpush1.bf16.msra.mxu0 %v278
        %632 = vmatprep.subr.bf16.mxu0 0
        %633 = vmatpush1.bf16.msra.mxu0 %v277
        %634 = vmatprep.subr.bf16.mxu0 0
        %635 = vmatpush1.bf16.msra.mxu0 %v276
        %636 = vmatprep.subr.bf16.mxu0 0
        %637 = vmatpush2.bf16.msra.mxu0 0
        %638 = vmatprep.subr.bf16.mxu0 0
        %639 = vmatpush2.bf16.msra.mxu0 0
        %640 = vmatprep.subr.bf16.mxu0 0
        %641 = vmatpush2.bf16.msra.mxu0 0
        %642 = vmatprep.subr.bf16.mxu0 0
        %643 = vmatpush2.bf16.msra.mxu0 0
        %644 = vmatprep.subr.bf16.mxu0 0
        %645 = vmatpush2.bf16.msra.mxu0 0
        %646 = vmatprep.subr.bf16.mxu0 0
        %647 = vmatpush2.bf16.msra.mxu0 0
        %648 = vmatprep.subr.bf16.mxu0 0
        %649 = vmatpush2.bf16.msra.mxu0 0
        %650 = vmatprep.subr.bf16.mxu0 0
        %651 = vmatpush2.bf16.msra.mxu0 0
        %652 = vmatprep.mubr.bf16.mxu0 0
        %653 = vmatmul.mubr.bf16.gmra.mxu0 %v614
        %v654 = vpop.f32.mrf.mxu0
        %v655 = vadd.f32 %v619, %v654
        %v656 = vpop.f32.mrf.mxu0
        %v657 = vpop.f32.mrf.mxu0
        %v658 = vpop.f32.mrf.mxu0
        %659 = vdwg.mxu0
        %v660 = vtanh.pop %v655
        %v661 = vpack.c.bf16 %v660, %v660
        %s662 = scalar_lea.vmem %s215, 28 [#allocation9]
        %663 = vst [vmem:[%s662] sm:$0xf] %v661
        %664 = vst [vmem:[#allocation2] sm:$0xf] %v661
        %s665 = sand.u32 %s97, 1
        %s666 = scalar_lea.sflag [#allocation5], %s665
        %s667 = sand.u32 %s97, 1
        %s668 = smul.addr %s667, 32
        %s669 = scalar_lea.vmem [#allocation9], %s668
        // Predicated region
        $region49: #{tpu_custom_call.1} parent=31 // pred_check
          %p670 = pneg %p107
        $region50: #{tpu_custom_call.1} parent=31 // pred_check_branch
          %672 = sbr.rel (%p670) target = $region52
        $region51: #{tpu_custom_call.1} parent=31 // pred_region
          %s673 = smul.u32 8, %s21
          %s675 = ssub.s32 512, 512
          %676 = vsyncadd %s666, %s675
          %s677 = smul.addr %s673, 64
          %s678 = scalar_lea.hbm %s3, %s677
          %s679 = sshll.u32 %s669, 4
          %s680 = int_to_ptr.vmem [resolvable:$true] %s679
          %685 = dma.vmem_to_hbm [thread:$0]  %s680, 512, %s678, %s666, 64, 64, 4
        $region52: #{tpu_custom_call.1} parent=31 // pred_fallthru
          _
      $region32: #{tpu_custom_call.1} parent=5 // pred_fallthru
        _
      %p686 = scmp.le.s32.totalorder 2, %s16
      // Predicated region
      $region53: #{tpu_custom_call.1} parent=5 // pred_check
        %p687 = pneg %p686
      $region54: #{tpu_custom_call.1} parent=5 // pred_check_branch
        %689 = sbr.rel (%p687) target = $region56
      $region55: #{tpu_custom_call.1} parent=5 // pred_region
        %s690 = ssub.s32 %s16, 2
        // Predicated region
        $region57: #{tpu_custom_call.1} parent=55 // pred_check
          %p691 = pneg %p113
        $region58: #{tpu_custom_call.1} parent=55 // pred_check_branch
          %693 = sbr.rel (%p691) target = $region60
        $region59: #{tpu_custom_call.1} parent=55 // pred_region
          %s694 = sand.u32 %s98, 1
          %s695 = scalar_lea.sflag [#allocation5], %s694
          %s696 = sand.u32 %s98, 1
          %s697 = smul.addr %s696, 32
          %s698 = scalar_lea.vmem [#allocation9], %s697
          %699 = dma.done %s695, 512
        $region60: #{tpu_custom_call.1} parent=55 // pred_fallthru
          _
      $region56: #{tpu_custom_call.1} parent=5 // pred_fallthru
        _
    $region6: #{tpu_custom_call.1} parent=1 // loop_footer
      %s20 = sadd.s32 1, %s16
    $region7: #{tpu_custom_call.1} parent=1 // loop_footer_branch
      %15 = sbr.rel target = $region3
    $region8: #{tpu_custom_call.1} parent=1 // loop_exit
      _
    %700 = vsyncpa [#allocation4], 1
    %s701 = scalar_lea.sflag [#allocation4], 1
    %702 = vsyncpa %s701, 1
    %703 = vsyncpa [#allocation7], 1
    %704 = vsyncpa [#allocation5], 1
    %s705 = scalar_lea.sflag [#allocation5], 1
    %706 = vsyncpa %s705, 1

</llo_original>
